<compile_context>
chip_gen: v7x
topology: tpu7x:2x2x1
jax: 0.10.0
libtpu: 0.0.40
codegen_flags: <defaults>
</compile_context>

<pallas_src>
import jax
import jax.numpy as jnp
from jax.experimental import pallas as pl
from jax.experimental.pallas import tpu as pltpu


def value_net_kernel(x_ref, w1_ref, b1_ref, w2_ref, b2_ref, o_ref):
    bt, s = x_ref.shape
    x = x_ref[...]                                      # [BT, S]

    if s <= 8:
        # Tiny-K regime: K=s fills <=8/256 of the MXU systolic depth, so MXU
        # push + result-drain latency would dominate.  Unrolled VPU MACs.
        h = x[:, 0:1] * w1_ref[0:1, :]                  # [BT,1]*[1,H] -> [BT,H]
        for k in range(1, s):
            h = h + x[:, k:k + 1] * w1_ref[k:k + 1, :]
        h = h + b1_ref[...]
    else:
        h = jnp.dot(x, w1_ref[...],
                    preferred_element_type=jnp.float32) + b1_ref[...]

    h = jnp.maximum(h, 0.0)                             # ReLU (f32, VPU)

    # fc2 has a single output feature: VPU multiply + XLU lane reduction
    # instead of an N=1 MXU matmul (which would waste ~all output lanes and
    # still pay the full result-FIFO/MRB drain).
    v = jnp.sum(h * w2_ref[...], axis=-1) + b2_ref[0]   # [BT]

    # Lane-dense store: a [1, 1, BT] row instead of a [BT, 1] column.
    o_ref[...] = v[None, None, :].astype(o_ref.dtype)


def _round_up(n, m):
    return (n + m - 1) // m * m


def _choose_batch_tile(B, S, H, *, max_tile=4096,
                       vmem_budget=16 * 1024 * 1024):
    """Biggest batch tile (multiple of 8) whose padded VMEM footprint
    (double-buffered x block + [BT, H] f32 intermediate) fits the budget."""
    lanes_s = _round_up(max(S, 1), 128)                 # x rows pad to 128 lanes
    lanes_h = _round_up(max(H, 1), 128)                 # h rows pad to 128 lanes
    per_row_bytes = 4 * (2 * lanes_s + lanes_h)
    cap = (vmem_budget // per_row_bytes) // 8 * 8
    cap = max(8, min(cap, max_tile))
    return min(_round_up(B, 8), cap)


def value_net_forward(x, w1_t, b1, w2_t, b2, *, b_tile=None):
    """x: [B, S]; w1_t: [S, H]; b1: [H]; w2_t: [H, 1]; b2: [1] -> [B, 1] f32."""
    B, S = x.shape
    H = w1_t.shape[1]

    bt = _choose_batch_tile(B, S, H) if b_tile is None \
        else min(_round_up(B, 8), _round_up(b_tile, 8))
    B_pad = _round_up(B, bt)
    x = x.astype(jnp.float32)
    if B_pad != B:
        x = jnp.pad(x, ((0, B_pad - B), (0, 0)))
    num_tiles = pl.cdiv(B_pad, bt)

    w1_t = w1_t.astype(jnp.float32)
    b1_row = b1.reshape(1, H).astype(jnp.float32)
    w2_row = w2_t.reshape(1, H).astype(jnp.float32)     # (H,1) column -> (1,H) row
    b2_s = b2.reshape(1).astype(jnp.float32)            # scalar, lives in SMEM

    cost = pl.CostEstimate(
        flops=2 * B_pad * S * H + 2 * B_pad * H,
        transcendentals=0,
        bytes_accessed=4 * (B_pad * S + S * H + 2 * H + 1 + B_pad),
    )

    out = pl.pallas_call(
        value_net_kernel,
        out_shape=jax.ShapeDtypeStruct((num_tiles, 1, bt), jnp.float32),
        grid=(num_tiles,),
        in_specs=[
            pl.BlockSpec((bt, S), lambda i: (i, 0)),          # x: streamed per tile
            pl.BlockSpec((S, H), lambda i: (0, 0)),           # w1_t: resident
            pl.BlockSpec((1, H), lambda i: (0, 0)),           # b1: resident
            pl.BlockSpec((1, H), lambda i: (0, 0)),           # w2 row: resident
            pl.BlockSpec(memory_space=pltpu.MemorySpace.SMEM),  # b2 scalar
        ],
        out_specs=pl.BlockSpec((1, 1, bt), lambda i: (i, 0, 0)),
        compiler_params=pltpu.CompilerParams(
            dimension_semantics=("parallel",),
            vmem_limit_bytes=32 * 1024 * 1024,
        ),
        cost_estimate=cost,
    )(x, w1_t, b1_row, w2_row, b2_s)

    # Lane-dense [num_tiles, 1, bt] slab back to the module's [B, 1] column.
    return out.reshape(-1)[:B].reshape(B, 1)


def reference_forward(x, w1_t, b1, w2_t, b2):
    h = jnp.maximum(x @ w1_t + b1, 0.0)
    return h @ w2_t + b2


if __name__ == "__main__":
    # Small shapes consistent with ValueNet(state_dim, hidden_dim)
    batch, state_dim, hidden_dim = 8, 4, 32

    key = jax.random.PRNGKey(0)
    k_x, k_w1, k_b1, k_w2, k_b2, k_big = jax.random.split(key, 6)

    x = jax.random.normal(k_x, (batch, state_dim), dtype=jnp.float32)

    # Deterministic param init (Kaiming-uniform-ish bounds like nn.Linear default)
    bound1 = 1.0 / jnp.sqrt(state_dim)
    bound2 = 1.0 / jnp.sqrt(hidden_dim)
    w1_t = jax.random.uniform(k_w1, (state_dim, hidden_dim),
                              minval=-bound1, maxval=bound1, dtype=jnp.float32)
    b1 = jax.random.uniform(k_b1, (hidden_dim,),
                            minval=-bound1, maxval=bound1, dtype=jnp.float32)
    w2_t = jax.random.uniform(k_w2, (hidden_dim, 1),
                              minval=-bound2, maxval=bound2, dtype=jnp.float32)
    b2 = jax.random.uniform(k_b2, (1,),
                            minval=-bound2, maxval=bound2, dtype=jnp.float32)

    # Small demo case (single grid step).
    out = jax.block_until_ready(value_net_forward(x, w1_t, b1, w2_t, b2))
    ref = reference_forward(x, w1_t, b1, w2_t, b2)
    assert out.shape == (batch, 1), out.shape
    assert jnp.allclose(out, ref, atol=1e-5, rtol=1e-5), (out, ref)

    # Larger batch with an explicit small tile: exercises batch tiling
    # (multiple grid steps), padding and the lane-dense output path.
    big_b = 1100
    x_big = jax.random.normal(k_big, (big_b, state_dim), dtype=jnp.float32)
    out_big = jax.block_until_ready(
        value_net_forward(x_big, w1_t, b1, w2_t, b2, b_tile=256))
    ref_big = reference_forward(x_big, w1_t, b1, w2_t, b2)
    assert out_big.shape == (big_b, 1), out_big.shape
    assert jnp.allclose(out_big, ref_big, atol=1e-4, rtol=1e-4)

    # Same large batch with the adaptive (auto) tile — single grid step here.
    out_auto = jax.block_until_ready(
        value_net_forward(x_big, w1_t, b1, w2_t, b2))
    assert jnp.allclose(out_auto, ref_big, atol=1e-4, rtol=1e-4)

    print("KERNEL_OK")
</pallas_src>

<mosaic_0001>
module attributes {stable_mosaic.version = 11 : i64} {
  func.func @value_net_kernel(%arg0: i32, %arg1: memref<8x4xf32, #tpu.memory_space<vmem>>, %arg2: memref<4x32xf32, #tpu.memory_space<vmem>>, %arg3: memref<1x32xf32, #tpu.memory_space<vmem>>, %arg4: memref<1x32xf32, #tpu.memory_space<vmem>>, %arg5: memref<1xf32, #tpu.memory_space<smem>>, %arg6: memref<1x1x8xf32, #tpu.memory_space<vmem>>) attributes {dimension_semantics = [#tpu.dimension_semantics<parallel>], iteration_bounds = array<i64: 1>, scalar_prefetch = 0 : i64, scratch_operands = 0 : i64, tpu.core_type = #tpu.core_type<tc>, window_params = [{transform_indices = @transform_0, window_bounds = array<i64: 8, 4>}, {pipeline_mode = #tpu.pipeline_mode<synchronous>, transform_indices = @transform_1, window_bounds = array<i64: 4, 32>}, {pipeline_mode = #tpu.pipeline_mode<synchronous>, transform_indices = @transform_2, window_bounds = array<i64: 1, 32>}, {pipeline_mode = #tpu.pipeline_mode<synchronous>, transform_indices = @transform_3, window_bounds = array<i64: 1, 32>}, {transform_indices = @transform_4, window_bounds = array<i64: 1>}, {transform_indices = @transform_5, window_bounds = array<i64: 1, 1, 8>}]} {
    %c0 = arith.constant 0 : index
    %c0_0 = arith.constant 0 : index
    %0 = vector.load %arg1[%c0, %c0_0] : memref<8x4xf32, #tpu.memory_space<vmem>>, vector<8x4xf32>
    %1 = vector.extract_strided_slice %0 {offsets = [0, 0], sizes = [8, 1], strides = [1, 1]} : vector<8x4xf32> to vector<8x1xf32>
    %c0_1 = arith.constant 0 : index
    %c0_2 = arith.constant 0 : index
    %2 = vector.load %arg2[%c0_1, %c0_2] : memref<4x32xf32, #tpu.memory_space<vmem>>, vector<1x32xf32>
    %3 = vector.broadcast %1 : vector<8x1xf32> to vector<8x32xf32>
    %4 = vector.broadcast %2 : vector<1x32xf32> to vector<8x32xf32>
    %5 = arith.mulf %3, %4 : vector<8x32xf32>
    %6 = vector.extract_strided_slice %0 {offsets = [0, 1], sizes = [8, 1], strides = [1, 1]} : vector<8x4xf32> to vector<8x1xf32>
    %c1 = arith.constant 1 : index
    %c0_3 = arith.constant 0 : index
    %7 = vector.load %arg2[%c1, %c0_3] : memref<4x32xf32, #tpu.memory_space<vmem>>, vector<1x32xf32>
    %8 = vector.broadcast %6 : vector<8x1xf32> to vector<8x32xf32>
    %9 = vector.broadcast %7 : vector<1x32xf32> to vector<8x32xf32>
    %10 = arith.mulf %8, %9 : vector<8x32xf32>
    %11 = arith.addf %5, %10 : vector<8x32xf32>
    %12 = vector.extract_strided_slice %0 {offsets = [0, 2], sizes = [8, 1], strides = [1, 1]} : vector<8x4xf32> to vector<8x1xf32>
    %c2 = arith.constant 2 : index
    %c0_4 = arith.constant 0 : index
    %13 = vector.load %arg2[%c2, %c0_4] : memref<4x32xf32, #tpu.memory_space<vmem>>, vector<1x32xf32>
    %14 = vector.broadcast %12 : vector<8x1xf32> to vector<8x32xf32>
    %15 = vector.broadcast %13 : vector<1x32xf32> to vector<8x32xf32>
    %16 = arith.mulf %14, %15 : vector<8x32xf32>
    %17 = arith.addf %11, %16 : vector<8x32xf32>
    %18 = vector.extract_strided_slice %0 {offsets = [0, 3], sizes = [8, 1], strides = [1, 1]} : vector<8x4xf32> to vector<8x1xf32>
    %c3 = arith.constant 3 : index
    %c0_5 = arith.constant 0 : index
    %19 = vector.load %arg2[%c3, %c0_5] : memref<4x32xf32, #tpu.memory_space<vmem>>, vector<1x32xf32>
    %20 = vector.broadcast %18 : vector<8x1xf32> to vector<8x32xf32>
    %21 = vector.broadcast %19 : vector<1x32xf32> to vector<8x32xf32>
    %22 = arith.mulf %20, %21 : vector<8x32xf32>
    %23 = arith.addf %17, %22 : vector<8x32xf32>
    %c0_6 = arith.constant 0 : index
    %c0_7 = arith.constant 0 : index
    %24 = vector.load %arg3[%c0_6, %c0_7] : memref<1x32xf32, #tpu.memory_space<vmem>>, vector<1x32xf32>
    %25 = vector.broadcast %24 : vector<1x32xf32> to vector<8x32xf32>
    %26 = arith.addf %23, %25 : vector<8x32xf32>
    %cst = arith.constant 0.000000e+00 : f32
    %27 = vector.broadcast %cst : f32 to vector<8x32xf32>
    %28 = arith.maximumf %26, %27 : vector<8x32xf32>
    %c0_8 = arith.constant 0 : index
    %c0_9 = arith.constant 0 : index
    %29 = vector.load %arg4[%c0_8, %c0_9] : memref<1x32xf32, #tpu.memory_space<vmem>>, vector<1x32xf32>
    %30 = vector.broadcast %29 : vector<1x32xf32> to vector<8x32xf32>
    %31 = arith.mulf %28, %30 : vector<8x32xf32>
    %cst_10 = arith.constant dense<0.000000e+00> : vector<8xf32>
    %32 = vector.multi_reduction <add>, %31, %cst_10 [1] : vector<8x32xf32> to vector<8xf32>
    %c0_11 = arith.constant 0 : index
    %33 = memref.load %arg5[%c0_11] : memref<1xf32, #tpu.memory_space<smem>>
    %34 = vector.broadcast %33 : f32 to vector<8xf32>
    %35 = arith.addf %32, %34 : vector<8xf32>
    %36 = vector.shape_cast %35 : vector<8xf32> to vector<1x1x8xf32>
    %c0_12 = arith.constant 0 : index
    %c0_13 = arith.constant 0 : index
    %c0_14 = arith.constant 0 : index
    %37 = vector.load %arg6[%c0_12, %c0_13, %c0_14] : memref<1x1x8xf32, #tpu.memory_space<vmem>>, vector<1x1x8xf32>
    tpu.vector_store %arg6[%c0_12, %c0_13, %c0_14], %36 {strides = array<i32>} : memref<1x1x8xf32, #tpu.memory_space<vmem>>, vector<1x1x8xf32>,
    return
  }
  func.func @transform_0(%arg0: i32) -> (i32, i32) {
    %c0_i32 = arith.constant 0 : i32
    %c0_i32_0 = arith.constant 0 : i32
    return %arg0, %c0_i32 : i32, i32
  }
  func.func @transform_1(%arg0: i32) -> (i32, i32) {
    %c0_i32 = arith.constant 0 : i32
    %c0_i32_0 = arith.constant 0 : i32
    %c0_i32_1 = arith.constant 0 : i32
    return %c0_i32, %c0_i32_0 : i32, i32
  }
  func.func @transform_2(%arg0: i32) -> (i32, i32) {
    %c0_i32 = arith.constant 0 : i32
    %c0_i32_0 = arith.constant 0 : i32
    %c0_i32_1 = arith.constant 0 : i32
    return %c0_i32, %c0_i32_0 : i32, i32
  }
  func.func @transform_3(%arg0: i32) -> (i32, i32) {
    %c0_i32 = arith.constant 0 : i32
    %c0_i32_0 = arith.constant 0 : i32
    %c0_i32_1 = arith.constant 0 : i32
    return %c0_i32, %c0_i32_0 : i32, i32
  }
  func.func @transform_4(%arg0: i32) -> i32 {
    %c0_i32 = arith.constant 0 : i32
    %c0_i32_0 = arith.constant 0 : i32
    return %c0_i32 : i32
  }
  func.func @transform_5(%arg0: i32) -> (i32, i32, i32) {
    %c0_i32 = arith.constant 0 : i32
    %c0_i32_0 = arith.constant 0 : i32
    %c0_i32_1 = arith.constant 0 : i32
    return %arg0, %c0_i32, %c0_i32_0 : i32, i32, i32
  }
}

</mosaic_0001>

<llo_original>
// kernel: tpu_custom_call.1
$region0: #{tpu_custom_call.1}
  #allocation0 [shape = 'u32[]', space=smem, size = 0x4, offset = 0x4, fixed_abs, tag = 'smem constant byte address 0x4 - core index']
  #allocation1 [shape = 'u32[144,128]{1,0:T(1,128)}', space=vmem, size = 0x12000, scoped, tag = 'internal scratch']
  #allocation2 [shape = 'f32[1]{0:T(128)S(6)}', space=smem, size = 0x200, scoped, tag = 'scoped memory for tpu_custom_call.1']
  %s0 = inlined_call_operand.vmem [shape: f32[8,4], index: 0, kind: input, shape index: {}]
  %s1 = inlined_call_operand.vmem [shape: f32[4,32], index: 1, kind: input, shape index: {}]
  %s2 = inlined_call_operand.vmem [shape: f32[1,32], index: 2, kind: input, shape index: {}]
  %s3 = inlined_call_operand.vmem [shape: f32[1,32], index: 3, kind: input, shape index: {}]
  %s4 = inlined_call_operand.<no memory space> [shape: f32[1], index: 4, kind: input, shape index: {}]
  %s5 = inlined_call_operand.hbm [shape: f32[1,1,8], index: 5, kind: output, shape index: {}]
  %s6 = sld [smem:[#allocation0]]
  $region30: #{tpu_custom_call.1} parent=0
    _
  %s8 = ssub.s32 1, %s6
  %s9 = scalar_select 0, %s8, %s6
  %10 = sst [smem:[#allocation2]] %s4
  $region1: #{tpu_custom_call.1} parent=0
    #allocation3 [shape = 'u8[512]{0}', space=vmem, size = 0x400, scoped, tag = 'output window, operand 0, single buffered']
    #allocation4 [shape = 's32[1]{0}', space=sflag, size = 0x4, scoped, tag = 'scoped memory for tpu_custom_call.1']
    %11 = vsyncpa [#allocation4], 0
    // Predicated region
    $region2: #{tpu_custom_call.1} parent=1 // pred_check
      _
    $region3: #{tpu_custom_call.1} parent=1 // pred_check_branch
      %13 = sbr.rel (0) target = $region5
    $region4: #{tpu_custom_call.1} parent=1 // pred_region
      _
    $region5: #{tpu_custom_call.1} parent=1 // pred_fallthru
      _
    // Predicated region
    $region6: #{tpu_custom_call.1} parent=1 // pred_check
      _
    $region7: #{tpu_custom_call.1} parent=1 // pred_check_branch
      %15 = sbr.rel (0) target = $region9
    $region8: #{tpu_custom_call.1} parent=1 // pred_region
      _
    $region9: #{tpu_custom_call.1} parent=1 // pred_fallthru
      _
    // Predicated region
    $region10: #{tpu_custom_call.1} parent=1 // pred_check
      _
    $region11: #{tpu_custom_call.1} parent=1 // pred_check_branch
      %17 = sbr.rel (0) target = $region13
    $region12: #{tpu_custom_call.1} parent=1 // pred_region
      _
    $region13: #{tpu_custom_call.1} parent=1 // pred_fallthru
      _
    // Predicated region
    $region14: #{tpu_custom_call.1} parent=1 // pred_check
      _
    $region15: #{tpu_custom_call.1} parent=1 // pred_check_branch
      %19 = sbr.rel (0) target = $region17
    $region16: #{tpu_custom_call.1} parent=1 // pred_region
      _
    $region17: #{tpu_custom_call.1} parent=1 // pred_fallthru
      _
    // Predicated region
    $region18: #{tpu_custom_call.1} parent=1 // pred_check
      _
    $region19: #{tpu_custom_call.1} parent=1 // pred_check_branch
      %21 = sbr.rel (0) target = $region21
    $region20: #{tpu_custom_call.1} parent=1 // pred_region
      _
    $region21: #{tpu_custom_call.1} parent=1 // pred_fallthru
      _
    %v22 = vld [vmem:[%s0] sm:$0xff]
    %v23 = vld [vmem:[%s1] sm:$0x1]
    %25 = vset.pattern.permute.xlu0 0
    %26 = vperm.xlu0 %25, %v22
    %v27 = vpop.permute.xlu0 %26
    %v29 = vlaneseq
    %v30 = vshrl.u32 %v29, 7
    %v31 = vsub.s32 0, %v30
    %v32 = vrot.slane %v23, %v31
    %v33 = vmul.f32 %v27, %v32
    %v34 = vld [vmem:[%s1 + $0x1] sm:$0x1]
    %35 = vset.pattern.permute.xlu0 1
    %36 = vperm.xlu0 %35, %v22
    %v37 = vpop.permute.xlu0 %36
    %v39 = vlaneseq
    %v40 = vshrl.u32 %v39, 7
    %v41 = vsub.s32 0, %v40
    %v42 = vrot.slane %v34, %v41
    %v43 = vmul.f32 %v37, %v42
    %v44 = vadd.f32 %v33, %v43
    %v45 = vld [vmem:[%s1 + $0x2] sm:$0x1]
    %46 = vset.pattern.permute.xlu0 2
    %47 = vperm.xlu0 %46, %v22
    %v48 = vpop.permute.xlu0 %47
    %v50 = vlaneseq
    %v51 = vshrl.u32 %v50, 7
    %v52 = vsub.s32 0, %v51
    %v53 = vrot.slane %v45, %v52
    %v54 = vmul.f32 %v48, %v53
    %v55 = vadd.f32 %v44, %v54
    %v56 = vld [vmem:[%s1 + $0x3] sm:$0x1]
    %57 = vset.pattern.permute.xlu0 3
    %58 = vperm.xlu0 %57, %v22
    %v59 = vpop.permute.xlu0 %58
    %v61 = vlaneseq
    %v62 = vshrl.u32 %v61, 7
    %v63 = vsub.s32 0, %v62
    %v64 = vrot.slane %v56, %v63
    %v65 = vmul.f32 %v59, %v64
    %v66 = vadd.f32 %v55, %v65
    %v67 = vld [vmem:[%s2] sm:$0x1]
    %v69 = vlaneseq
    %v70 = vshrl.u32 %v69, 7
    %v71 = vsub.s32 0, %v70
    %v72 = vrot.slane %v67, %v71
    %v74 = vadd.f32 %v66, %v72
    %v75 = vmax.f32 %v74, 0.0
    %v76 = vld [vmem:[%s3] sm:$0x1]
    %v78 = vlaneseq
    %v79 = vshrl.u32 %v78, 7
    %v80 = vsub.s32 0, %v79
    %v81 = vrot.slane %v76, %v80
    %v83 = vmul.f32 %v75, %v81
    %vm84 = vcmask 261120
    %v85 = vsel %vm84, %v83, 0.0
    %86 = vadd.xlane.f32.xlu0 %v85
    %v87 = vpop.xlane.xlu0 %86
    %s88 = sld [smem:[#allocation2]]
    %v89 = vstv %s88
    %v90 = vadd.f32 %v87, %v89
    %v92 = vlaneseq
    %v93 = vand.u32 %v92, 127
    %v94 = vlaneseq
    %v95 = vshrl.u32 %v94, 7
    %v96 = vsub.s32 %v93, %v95
    %v97 = vrot.slane %v90, %v96
    %vm99 = vcmask 57344
    %100 = vst.msk [vmem:[#allocation3] sm:$0x1] %vm99, %v97
    // Predicated region
    $region22: #{tpu_custom_call.1} parent=1 // pred_check
      _
    $region23: #{tpu_custom_call.1} parent=1 // pred_check_branch
      %102 = sbr.rel (0) target = $region25
    $region24: #{tpu_custom_call.1} parent=1 // pred_region
      %s104 = ssub.s32 16, 16
      %105 = vsyncadd [#allocation4], %s104
      %s107 = sshll.u32 [#allocation3], 4
      %s108 = int_to_ptr.vmem [resolvable:$true] %s107
      %110 = dma.vmem_to_hbm [thread:$0]  %s108, 16, %s5, [#allocation4]
    $region25: #{tpu_custom_call.1} parent=1 // pred_fallthru
      _
    // Predicated region
    $region26: #{tpu_custom_call.1} parent=1 // pred_check
      _
    $region27: #{tpu_custom_call.1} parent=1 // pred_check_branch
      %112 = sbr.rel (0) target = $region29
    $region28: #{tpu_custom_call.1} parent=1 // pred_region
      %113 = dma.done [#allocation4], 16
    $region29: #{tpu_custom_call.1} parent=1 // pred_fallthru
      _
    %114 = vsyncpa [#allocation4], 1

</llo_original>
